<compile_context>
chip_gen: v6e
topology: v6e:2x2x1
jax: 0.10.0
libtpu: 0.0.40
codegen_flags: <defaults>
</compile_context>

<pallas_src>
import functools

import jax
import jax.numpy as jnp
from jax import lax
from jax.experimental import pallas as pl
from jax.experimental.pallas import tpu as pltpu

_LANE = 128
_SUBLANE = 8
_TARGET_TILE_BYTES = 8 * 1024 * 1024     # ~8 MiB per input tile (VMEM, lane-padded estimate)
_VMEM_LIMIT = 40 * 1024 * 1024           # 2 inputs x 2 buffers x 8 MiB + scratch headroom


# ----------------------------------------------------------------------------
# Pallas kernel: tiled sum of squared differences (grid = (split, reduction))
# ----------------------------------------------------------------------------
def _mse_partial_kernel(x_ref, t_ref, o_ref, acc_ref, *,
                        rows, tile_rows, tiles_per_split, needs_mask, inv_n):
    c = pl.program_id(0)          # core-split axis ("parallel")
    i = pl.program_id(1)          # reduction axis ("arbitrary")

    @pl.when(i == 0)
    def _():
        acc_ref[...] = jnp.zeros_like(acc_ref)

    d = x_ref[...].astype(jnp.float32) - t_ref[...].astype(jnp.float32)
    if needs_mask:
        # Logical (unclamped) tile index; rows past `rows` (boundary padding or
        # a clamped overhang tile) contribute exactly 0 to the sum.
        tile = c * tiles_per_split + i
        row_ids = tile * tile_rows + lax.broadcasted_iota(jnp.int32, d.shape, 0)
        d = jnp.where(row_ids < rows, d, 0.0)

    # (1, C) partial sums: the sublane reduce lowers to the XLU (separate VLIW
    # slot); the accumulator stays tiny and off the vld/vst critical slots.
    acc_ref[...] += jnp.sum(d * d, axis=0, keepdims=True)

    @pl.when(i == pl.num_programs(1) - 1)
    def _():
        # One cross-lane reduce of a single row; 1/n normalization folded in.
        o_ref[0, 0] = jnp.sum(acc_ref[...]) * inv_n


# ----------------------------------------------------------------------------
# Layout helpers (copy-free views only; no jnp.pad materialization)
# ----------------------------------------------------------------------------
def _round_up(a, b):
    return pl.cdiv(a, b) * b


def _as_2d(x):
    """Copy-free 2-D view of x for the streaming reduction.

    Prefers a lane-dense flat view when numel allows it; otherwise collapses
    leading dims and keeps the true last dim as the (full-extent) lane axis.
    """
    n = x.size
    for lanes in (512, 256, 128):
        if n % lanes == 0:
            return x.reshape(n // lanes, lanes)
    if x.ndim >= 2:
        # TODO(synk): a huge *and* 128-unaligned last dim would need lane
        # tiling with masking; not required for the shapes exercised here.
        return x.reshape(-1, x.shape[-1])
    return x.reshape(1, n)


# ----------------------------------------------------------------------------
# Wrapper: BaseModel dispatch semantics
# ----------------------------------------------------------------------------
class BaseModelPallas:
    """Mirrors BaseModel: forward() -> loss() when training else predict()."""

    def __init__(self):
        self.training = False  # nn.Module default after .eval()

    def forward(self, *args, **kwargs):
        if self.training:
            return self.loss(*args, **kwargs)
        return self.predict(*args, **kwargs)

    __call__ = forward

    # TODO(synk): loss()/predict() are @abstractmethod in the reference module;
    # the concrete implementations below are deterministic placeholders
    # (identity / MSE), not checkpointed math.
    def predict(self, x):
        # Identity forward pass: a mathematical no-op needs no kernel; a copy
        # kernel would only add a full HBM read+write pass.
        return x

    def loss(self, x, target):
        if x.shape != target.shape or x.dtype != target.dtype:
            raise ValueError(
                f"loss() expects matching operands, got {x.shape}/{x.dtype} "
                f"vs {target.shape}/{target.dtype}")

        xs = _as_2d(x)
        ts = _as_2d(target)
        rows, cols = xs.shape
        n = x.size

        # ---- static tile / grid geometry ----------------------------------
        itemsize = xs.dtype.itemsize
        sub = _SUBLANE * max(1, 4 // itemsize)          # 8 (f32) / 16 (bf16) / 32 (int8)
        cols_padded = _round_up(cols, _LANE)            # VMEM lane padding estimate
        max_tile_rows = max(
            sub, (_TARGET_TILE_BYTES // (cols_padded * itemsize)) // sub * sub)

        if rows <= max_tile_rows:
            tile_rows = rows                             # single full-extent block (always legal)
        else:
            num_tiles = pl.cdiv(rows, max_tile_rows)     # balanced tiles: last-tile waste < 1 tile
            tile_rows = min(_round_up(pl.cdiv(rows, num_tiles), sub), max_tile_rows)

        tiles_total = pl.cdiv(rows, tile_rows)
        num_splits = 2 if tiles_total >= 2 else 1        # use both TCs on megacore parts (v7x)
        tiles_per_split = pl.cdiv(tiles_total, num_splits)
        scheduled_tiles = num_splits * tiles_per_split
        needs_mask = (rows % tile_rows != 0) or (scheduled_tiles != tiles_total)
        last_tile = tiles_total - 1

        def in_map(c, i):
            t = c * tiles_per_split + i
            if scheduled_tiles != tiles_total:
                # Overhanging grid step re-reads a valid tile; the in-kernel
                # row mask zeroes its contribution.
                t = jnp.minimum(t, last_tile)
            return (t, 0)

        kernel = functools.partial(
            _mse_partial_kernel,
            rows=rows, tile_rows=tile_rows, tiles_per_split=tiles_per_split,
            needs_mask=needs_mask, inv_n=1.0 / float(n))

        partials = pl.pallas_call(
            kernel,
            out_shape=jax.ShapeDtypeStruct((num_splits, 1), jnp.float32),
            grid=(num_splits, tiles_per_split),
            in_specs=[
                pl.BlockSpec((tile_rows, cols), in_map),
                pl.BlockSpec((tile_rows, cols), in_map),
            ],
            out_specs=pl.BlockSpec((1, 1), lambda c, i: (c, 0),
                                   memory_space=pltpu.SMEM),
            scratch_shapes=[pltpu.VMEM((1, cols), jnp.float32)],
            compiler_params=pltpu.CompilerParams(
                dimension_semantics=("parallel", "arbitrary"),
                vmem_limit_bytes=_VMEM_LIMIT,
            ),
        )(xs, ts)

        # Each per-split partial already carries the 1/n factor.
        return jnp.sum(partials)


# ----------------------------------------------------------------------------
# Main
# ----------------------------------------------------------------------------
if __name__ == "__main__":
    key = jax.random.PRNGKey(0)
    ks = jax.random.split(key, 8)
    model = BaseModelPallas()

    def check_loss(xx, tt, rtol=2e-4):
        model.training = True
        got = jax.block_until_ready(model(xx, tt))
        ref = jnp.mean((xx.astype(jnp.float32) - tt.astype(jnp.float32)) ** 2)
        assert bool(jnp.allclose(got, ref, rtol=rtol, atol=1e-6)), (got, ref)

    # --- small NCHW test: batch=2, channels=4, spatial=16x16 ----------------
    x = jax.random.normal(ks[0], (2, 4, 16, 16), dtype=jnp.float32)
    t = jax.random.normal(ks[1], (2, 4, 16, 16), dtype=jnp.float32)

    model.training = False                      # eval -> predict (identity)
    y = jax.block_until_ready(model(x))
    assert y.shape == x.shape and bool(jnp.allclose(y, x)), "predict mismatch"
    check_loss(x, t)                            # train -> loss (MSE)

    # --- ragged (numel % 128 != 0): fallback 2-D view, single tile ----------
    xr = jax.random.normal(ks[2], (3, 8, 181, 181), dtype=jnp.float32)
    tr = jax.random.normal(ks[3], (3, 8, 181, 181), dtype=jnp.float32)
    model.training = False
    assert bool(jnp.allclose(jax.block_until_ready(model(xr)), xr)), "ragged predict mismatch"
    check_loss(xr, tr)

    # --- ragged, multi-tile: 2-way core split + clamped overhang + row mask -
    xm = jax.random.normal(ks[4], (16, 7, 181, 181), dtype=jnp.float32)
    tm = jax.random.normal(ks[5], (16, 7, 181, 181), dtype=jnp.float32)
    check_loss(xm, tm)

    # --- lane-dense flat view, multi-tile (one tile per split) --------------
    xa = jax.random.normal(ks[6], (4, 8, 256, 512), dtype=jnp.float32)
    ta = jax.random.normal(ks[7], (4, 8, 256, 512), dtype=jnp.float32)
    check_loss(xa, ta)

    print("KERNEL_OK")
</pallas_src>

<mosaic_0001>
module attributes {stable_mosaic.version = 11 : i64} {
  func.func @_mse_partial_kernel(%arg0: i32, %arg1: i32, %arg2: memref<4x512xf32, #tpu.memory_space<vmem>>, %arg3: memref<4x512xf32, #tpu.memory_space<vmem>>, %arg4: memref<1x1xf32, #tpu.memory_space<smem>>, %arg5: memref<1x512xf32, #tpu.memory_space<vmem>>) attributes {dimension_semantics = [#tpu.dimension_semantics<parallel>, #tpu.dimension_semantics<arbitrary>], iteration_bounds = array<i64: 1, 1>, scalar_prefetch = 0 : i64, scratch_operands = 1 : i64, tpu.core_type = #tpu.core_type<tc>, window_params = [{transform_indices = @transform_0, window_bounds = array<i64: 4, 512>}, {transform_indices = @transform_1, window_bounds = array<i64: 4, 512>}, {transform_indices = @transform_2, window_bounds = array<i64: 1, 1>}]} {
    %c0_i32 = arith.constant 0 : i32
    %0 = arith.cmpi eq, %arg1, %c0_i32 : i32
    %1 = arith.extui %0 : i1 to i32
    %c0_i32_0 = arith.constant 0 : i32
    %2 = arith.cmpi ne, %1, %c0_i32_0 : i32
    scf.if %2 {
      %cst_10 = arith.constant 0.000000e+00 : f32
      %15 = vector.broadcast %cst_10 : f32 to vector<1x512xf32>
      %c0_11 = arith.constant 0 : index
      %c0_12 = arith.constant 0 : index
      %16 = vector.load %arg5[%c0_11, %c0_12] : memref<1x512xf32, #tpu.memory_space<vmem>>, vector<1x512xf32>
      tpu.vector_store %arg5[%c0_11, %c0_12], %15 {strides = array<i32>} : memref<1x512xf32, #tpu.memory_space<vmem>>, vector<1x512xf32>,
    } else {
    }
    %c0 = arith.constant 0 : index
    %c0_1 = arith.constant 0 : index
    %3 = vector.load %arg2[%c0, %c0_1] : memref<4x512xf32, #tpu.memory_space<vmem>>, vector<4x512xf32>
    %c0_2 = arith.constant 0 : index
    %c0_3 = arith.constant 0 : index
    %4 = vector.load %arg3[%c0_2, %c0_3] : memref<4x512xf32, #tpu.memory_space<vmem>>, vector<4x512xf32>
    %5 = arith.subf %3, %4 : vector<4x512xf32>
    %c0_4 = arith.constant 0 : index
    %c0_5 = arith.constant 0 : index
    %6 = vector.load %arg5[%c0_4, %c0_5] : memref<1x512xf32, #tpu.memory_space<vmem>>, vector<1x512xf32>
    %7 = arith.mulf %5, %5 : vector<4x512xf32>
    %cst = arith.constant dense<0.000000e+00> : vector<512xf32>
    %8 = vector.multi_reduction <add>, %7, %cst [0] : vector<4x512xf32> to vector<512xf32>
    %9 = vector.shape_cast %8 : vector<512xf32> to vector<1x512xf32>
    %10 = arith.addf %6, %9 : vector<1x512xf32>
    %c0_6 = arith.constant 0 : index
    %c0_7 = arith.constant 0 : index
    %11 = vector.load %arg5[%c0_6, %c0_7] : memref<1x512xf32, #tpu.memory_space<vmem>>, vector<1x512xf32>
    tpu.vector_store %arg5[%c0_6, %c0_7], %10 {strides = array<i32>} : memref<1x512xf32, #tpu.memory_space<vmem>>, vector<1x512xf32>,
    %c0_i32_8 = arith.constant 0 : i32
    %12 = arith.cmpi eq, %arg1, %c0_i32_8 : i32
    %13 = arith.extui %12 : i1 to i32
    %c0_i32_9 = arith.constant 0 : i32
    %14 = arith.cmpi ne, %13, %c0_i32_9 : i32
    scf.if %14 {
      %c0_10 = arith.constant 0 : index
      %c0_11 = arith.constant 0 : index
      %15 = vector.load %arg5[%c0_10, %c0_11] : memref<1x512xf32, #tpu.memory_space<vmem>>, vector<1x512xf32>
      %16 = vector.shape_cast %15 : vector<1x512xf32> to vector<1x1x512xf32>
      %cst_12 = arith.constant dense<0.000000e+00> : vector<1xf32>
      %17 = vector.multi_reduction <add>, %16, %cst_12 [1, 2] : vector<1x1x512xf32> to vector<1xf32>
      %18 = vector.shape_cast %17 : vector<1xf32> to vector<1x1x1xf32>
      %19 = vector.extract %18[0, 0, 0] : f32 from vector<1x1x1xf32>
      %cst_13 = arith.constant 4.8828125E-4 : f32
      %20 = arith.mulf %19, %cst_13 : f32
      %c0_14 = arith.constant 0 : index
      %c0_15 = arith.constant 0 : index
      %21 = memref.load %arg4[%c0_14, %c0_15] : memref<1x1xf32, #tpu.memory_space<smem>>
      memref.store %20, %arg4[%c0_14, %c0_15] : memref<1x1xf32, #tpu.memory_space<smem>>
    } else {
    }
    return
  }
  func.func @transform_0(%arg0: i32, %arg1: i32) -> (i32, i32) {
    %c1_i32 = arith.constant 1 : i32
    %0 = arith.muli %arg0, %c1_i32 : i32
    %1 = arith.addi %0, %arg1 : i32
    %c0_i32 = arith.constant 0 : i32
    %c0_i32_0 = arith.constant 0 : i32
    return %1, %c0_i32 : i32, i32
  }
  func.func @transform_1(%arg0: i32, %arg1: i32) -> (i32, i32) {
    %c1_i32 = arith.constant 1 : i32
    %0 = arith.muli %arg0, %c1_i32 : i32
    %1 = arith.addi %0, %arg1 : i32
    %c0_i32 = arith.constant 0 : i32
    %c0_i32_0 = arith.constant 0 : i32
    return %1, %c0_i32 : i32, i32
  }
  func.func @transform_2(%arg0: i32, %arg1: i32) -> (i32, i32) {
    %c0_i32 = arith.constant 0 : i32
    %c0_i32_0 = arith.constant 0 : i32
    return %arg0, %c0_i32 : i32, i32
  }
}

</mosaic_0001>

<llo_original>
// kernel: tpu_custom_call.1
$region0: #{tpu_custom_call.1}
  #allocation0 [shape = 'u32[]', space=smem, size = 0x4, offset = 0x4, fixed_abs, tag = 'smem constant byte address 0x4 - core index']
  #allocation1 [shape = 'u32[144,128]{1,0:T(1,128)}', space=vmem, size = 0x12000, scoped, tag = 'internal scratch']
  #allocation2 [shape = 'f32[1,512]{1,0:T(1,128)}', space=vmem, size = 0x800, scoped, tag = 'scratch operand']
  %s0 = inlined_call_operand.hbm [shape: f32[4,512], index: 0, kind: input, shape index: {}]
  %s1 = inlined_call_operand.hbm [shape: f32[4,512], index: 1, kind: input, shape index: {}]
  %s2 = inlined_call_operand.hbm [shape: f32[1,1], index: 2, kind: output, shape index: {}]
  %s3 = sld [smem:[#allocation0]]
  $region34: #{tpu_custom_call.1} parent=0
    _
  %s5 = ssub.s32 1, %s3
  %s6 = scalar_select 0, %s5, %s3
  $region1: #{tpu_custom_call.1} parent=0
    #allocation3 [shape = 'u8[8192]{0}', space=vmem, size = 0x2000, scoped, tag = 'input window, operand 0, single buffered']
    #allocation4 [shape = 's32[1]{0}', space=sflag, size = 0x4, scoped, tag = 'scoped memory for tpu_custom_call.1']
    #allocation5 [shape = 's32[1]{0}', space=sflag, size = 0x4, scoped, tag = 'scoped memory for tpu_custom_call.1']
    #allocation6 [shape = 'u8[8192]{0}', space=vmem, size = 0x2000, scoped, tag = 'input window, operand 1, single buffered']
    #allocation7 [shape = 's32[1]{0}', space=sflag, size = 0x4, scoped, tag = 'scoped memory for tpu_custom_call.1']
    #allocation8 [shape = 'u8[512]{0}', space=smem, size = 0x200, scoped, tag = 'output window, operand 0, single buffered']
    %7 = vsyncpa [#allocation4], 0
    %8 = vsyncpa [#allocation7], 0
    %9 = vsyncpa [#allocation5], 0
    // Predicated region
    $region2: #{tpu_custom_call.1} parent=1 // pred_check
      _
    $region3: #{tpu_custom_call.1} parent=1 // pred_check_branch
      %11 = sbr.rel (0) target = $region5
    $region4: #{tpu_custom_call.1} parent=1 // pred_region
      %s12 = sadd.s32 0, 0
      %s14 = ssub.s32 256, 256
      %15 = vsyncadd [#allocation4], %s14
      %s16 = smul.addr %s12, 4
      %s17 = smul.addr %s16, 64
      %s18 = scalar_lea.hbm %s0, %s17
      %s20 = sshll.u32 [#allocation3], 4
      %s21 = int_to_ptr.vmem [resolvable:$true] %s20
      %23 = dma.hbm_to_vmem [thread:$0]  %s18, 256, %s21, [#allocation4]
    $region5: #{tpu_custom_call.1} parent=1 // pred_fallthru
      _
    // Predicated region
    $region6: #{tpu_custom_call.1} parent=1 // pred_check
      _
    $region7: #{tpu_custom_call.1} parent=1 // pred_check_branch
      %25 = sbr.rel (0) target = $region9
    $region8: #{tpu_custom_call.1} parent=1 // pred_region
      %s26 = sadd.s32 0, 0
      %s28 = ssub.s32 256, 256
      %29 = vsyncadd [#allocation7], %s28
      %s30 = smul.addr %s26, 4
      %s31 = smul.addr %s30, 64
      %s32 = scalar_lea.hbm %s1, %s31
      %s34 = sshll.u32 [#allocation6], 4
      %s35 = int_to_ptr.vmem [resolvable:$true] %s34
      %37 = dma.hbm_to_vmem [thread:$0]  %s32, 256, %s35, [#allocation7]
    $region9: #{tpu_custom_call.1} parent=1 // pred_fallthru
      _
    // Predicated region
    $region10: #{tpu_custom_call.1} parent=1 // pred_check
      _
    $region11: #{tpu_custom_call.1} parent=1 // pred_check_branch
      %39 = sbr.rel (0) target = $region13
    $region12: #{tpu_custom_call.1} parent=1 // pred_region
      %40 = dma.done [#allocation4], 256
    $region13: #{tpu_custom_call.1} parent=1 // pred_fallthru
      _
    // Predicated region
    $region14: #{tpu_custom_call.1} parent=1 // pred_check
      _
    $region15: #{tpu_custom_call.1} parent=1 // pred_check_branch
      %42 = sbr.rel (0) target = $region17
    $region16: #{tpu_custom_call.1} parent=1 // pred_region
      %43 = dma.done [#allocation7], 256
    $region17: #{tpu_custom_call.1} parent=1 // pred_fallthru
      _
    %s44 = sadd.s32 0, 0
    %s45 = sadd.s32 0, 0
    %p46 = scmp.eq.s32.totalorder 0, 0
    // Predicated region
    $region18: #{tpu_custom_call.1} parent=1 // pred_check
      %p47 = pneg %p46
    $region19: #{tpu_custom_call.1} parent=1 // pred_check_branch
      %49 = sbr.rel (%p47) target = $region21
    $region20: #{tpu_custom_call.1} parent=1 // pred_region
      %v50 = vlaneseq
      %vm51 = vcmp.ge.s32.totalorder %v50, 0
      %vm52 = vcmp.lt.s32.totalorder %v50, 512
      %vm53 = vmand %vm51, %vm52
      %54 = vst.msk [vmem:[#allocation2] sm:$0xf] %vm53, 0.0
    $region21: #{tpu_custom_call.1} parent=1 // pred_fallthru
      _
    %v55 = vld [vmem:[#allocation3] sm:$0xff]
    %v56 = vld [vmem:[#allocation3 + $0x8] sm:$0xff]
    %v57 = vld [vmem:[#allocation6] sm:$0xff]
    %v58 = vld [vmem:[#allocation6 + $0x8] sm:$0xff]
    %v59 = vsub.f32 %v55, %v57
    %v60 = vsub.f32 %v56, %v58
    %v61 = vld [vmem:[#allocation2] sm:$0xf]
    %v62 = vmul.f32 %v59, %v59
    %v63 = vmul.f32 %v60, %v60
    %v66 = vcombine.high %v62, %v62
    %v67 = vcombine.high %v63, %v63
    %vm70 = vcmask 1043456
    %v71 = vsel %vm70, %v62, 0.0
    %v72 = vrot.slane %v71, 4
    %v73 = vadd.f32 %v71, %v72
    %v74 = vrot.slane %v73, 2
    %v75 = vadd.f32 %v73, %v74
    %v76 = vrot.slane %v75, 1
    %v77 = vadd.f32 %v75, %v76
    %v78 = vsel %vm70, %v66, 0.0
    %v79 = vrot.slane %v78, 4
    %v80 = vadd.f32 %v78, %v79
    %v81 = vrot.slane %v80, 2
    %v82 = vadd.f32 %v80, %v81
    %v83 = vrot.slane %v82, 1
    %v84 = vadd.f32 %v82, %v83
    %v85 = vsel %vm70, %v63, 0.0
    %v86 = vrot.slane %v85, 4
    %v87 = vadd.f32 %v85, %v86
    %v88 = vrot.slane %v87, 2
    %v89 = vadd.f32 %v87, %v88
    %v90 = vrot.slane %v89, 1
    %v91 = vadd.f32 %v89, %v90
    %v92 = vsel %vm70, %v67, 0.0
    %v93 = vrot.slane %v92, 4
    %v94 = vadd.f32 %v92, %v93
    %v95 = vrot.slane %v94, 2
    %v96 = vadd.f32 %v94, %v95
    %v97 = vrot.slane %v96, 1
    %v98 = vadd.f32 %v96, %v97
    %v103 = vcombine.low %v77, %v84
    %v104 = vcombine.low %v91, %v98
    %v106 = vunpack.c.l.s4 1966171168
    %v107 = vunpack.c.0.s8 %v106
    %v108 = vlaneseq
    %v109 = vshrl.u32 %v108, 7
    %v110 = vsub.s32 %v107, %v109
    %v111 = vrot.slane %v103, %v110
    %v113 = vunpack.c.l.s4 1966171168
    %v114 = vunpack.c.0.s8 %v113
    %v115 = vlaneseq
    %v116 = vshrl.u32 %v115, 7
    %v117 = vsub.s32 %v114, %v116
    %v118 = vrot.slane %v104, %v117
    %v119 = vcombine.low %v111, %v118
    %v121 = vunpack.c.l.s4 1966171168
    %v122 = vunpack.c.0.s8 %v121
    %v123 = vlaneseq
    %v124 = vshrl.u32 %v123, 7
    %v125 = vsub.s32 %v122, %v124
    %v126 = vrot.slane %v119, %v125
    %v128 = vadd.f32 %v61, %v126
    %v129 = vlaneseq
    %vm130 = vcmp.ge.s32.totalorder %v129, 0
    %vm131 = vcmp.lt.s32.totalorder %v129, 512
    %vm132 = vmand %vm130, %vm131
    %133 = vst.msk [vmem:[#allocation2] sm:$0xf] %vm132, %v128
    // Predicated region
    $region22: #{tpu_custom_call.1} parent=1 // pred_check
      %p134 = pneg %p46
    $region23: #{tpu_custom_call.1} parent=1 // pred_check_branch
      %136 = sbr.rel (%p134) target = $region25
    $region24: #{tpu_custom_call.1} parent=1 // pred_region
      %v137 = vld [vmem:[#allocation2] sm:$0xf]
      %v139 = vlaneseq
      %v140 = vshrl.u32 %v139, 7
      %v141 = vsub.s32 0, %v140
      %v142 = vrot.slane %v137, %v141
      %v143 = vlaneseq
      %v144 = vshrl.u32 %v143, 7
      %v145 = vsub.s32 1, %v144
      %v146 = vrot.slane %v137, %v145
      %v147 = vlaneseq
      %v148 = vshrl.u32 %v147, 7
      %v149 = vsub.s32 2, %v148
      %v150 = vrot.slane %v137, %v149
      %v151 = vlaneseq
      %v152 = vshrl.u32 %v151, 7
      %v153 = vsub.s32 3, %v152
      %v154 = vrot.slane %v137, %v153
      %vm159 = vcmask 1040384
      %v160 = vsel %vm159, %v142, 0.0
      %v161 = vsel %vm159, %v146, 0.0
      %v162 = vadd.f32 %v160, %v161
      %v163 = vsel %vm159, %v150, 0.0
      %v164 = vadd.f32 %v162, %v163
      %v165 = vsel %vm159, %v154, 0.0
      %v166 = vadd.f32 %v164, %v165
      %167 = vadd.xlane.f32.xlu0 %v166
      %v168 = vpop.xlane.xlu0 %167
      %v169 = vrot.slane %v168, 4
      %v170 = vadd.f32 %v168, %v169
      %v171 = vrot.slane %v170, 2
      %v172 = vadd.f32 %v170, %v171
      %v173 = vrot.slane %v172, 1
      %v174 = vadd.f32 %v172, %v173
      %s175 = vtos %v174
      %s176 = smul.f32 %s175, 0.00048828125
      %s177 = scalar_lea.smem [#allocation8], 0
      %178 = sst [smem:[%s177]] %s176
    $region25: #{tpu_custom_call.1} parent=1 // pred_fallthru
      _
    // Predicated region
    $region26: #{tpu_custom_call.1} parent=1 // pred_check
      _
    $region27: #{tpu_custom_call.1} parent=1 // pred_check_branch
      %180 = sbr.rel (0) target = $region29
    $region28: #{tpu_custom_call.1} parent=1 // pred_region
      %s182 = ssub.s32 16, 16
      %183 = vsyncadd [#allocation5], %s182
      %186 = dma.smem_to_hbm [#allocation8], 16, %s2, [#allocation5]
    $region29: #{tpu_custom_call.1} parent=1 // pred_fallthru
      _
    // Predicated region
    $region30: #{tpu_custom_call.1} parent=1 // pred_check
      _
    $region31: #{tpu_custom_call.1} parent=1 // pred_check_branch
      %188 = sbr.rel (0) target = $region33
    $region32: #{tpu_custom_call.1} parent=1 // pred_region
      %189 = dma.done [#allocation5], 16
    $region33: #{tpu_custom_call.1} parent=1 // pred_fallthru
      _
    %190 = sfence
    %191 = vsyncpa [#allocation4], 1
    %192 = vsyncpa [#allocation7], 1
    %193 = vsyncpa [#allocation5], 1

</llo_original>
